<compile_context>
chip_gen: v5e
topology: v5e:2x2
jax: 0.10.0
libtpu: 0.0.40
codegen_flags: <defaults>
</compile_context>

<pallas_src>
import functools

import numpy as np
import jax
import jax.numpy as jnp
from jax.experimental import pallas as pl
from jax.experimental.pallas import tpu as pltpu


# ---------------------------------------------------------------------------
# Fused Pallas kernel
# ---------------------------------------------------------------------------
def _fused_quantile_loss_kernel(sf_ref, qv_ref, preds_ref, tgt_ref, w_ref,
                                out_ref, acc_ref, *, n):
    # sf_ref:    (3,)        SMEM  [inv_count, l1_pen, l2_pen]
    # qv_ref:    (Q, 1)      VMEM  resident
    # preds_ref: (Q, TN)     VMEM  streamed lane tile (N on lanes)
    # tgt_ref:   (TR, TN)    VMEM  streamed lane tile (TR = 1 or Q)
    # w_ref:     (RW, 128)   VMEM  resident, all penalized weights flattened
    # out_ref:   (1, 8, 128) VMEM  this partition's partial result
    # acc_ref:   (Q, 1)      VMEM  f32 per-quantile pinball partial sums
    c = pl.program_id(0)                 # partition axis ("parallel", 2 TCs on v7x)
    i = pl.program_id(1)                 # lane-tile reduction axis ("arbitrary")
    tn = preds_ref.shape[1]

    @pl.when(i == 0)
    def _init():
        acc_ref[...] = jnp.zeros_like(acc_ref)

    qv = qv_ref[...].astype(jnp.float32)          # (Q, 1)
    preds = preds_ref[...].astype(jnp.float32)    # (Q, TN)
    tgt = tgt_ref[...].astype(jnp.float32)        # (1|Q, TN), sublane-broadcasts

    # Global lane index of this *logical* tile.  Tiles past the end of the
    # data (ragged tail, or the duplicated clamped tile when the tile count is
    # odd) are masked with a select so garbage/NaN lanes contribute exactly 0.
    tile = c * pl.num_programs(1) + i
    lane = jax.lax.broadcasted_iota(jnp.int32, (1, tn), 1)
    valid = (tile * tn + lane) < n                # (1, TN) bool

    err = jnp.where(valid, tgt - preds, 0.0)      # (Q, TN)
    relu = jnp.maximum(-err, 0.0)                 # relu(preds - tgt); 0 where masked
    # pinball identity: max((q-1)e, qe) = q*e + relu(-e)
    s_err = jnp.sum(err, axis=1, keepdims=True)   # (Q, 1)   lane reduce (XLU)
    s_relu = jnp.sum(relu, axis=1, keepdims=True) # (Q, 1)
    acc_ref[...] += qv * s_err + s_relu

    @pl.when(i == pl.num_programs(1) - 1)
    def _finalize():
        inv_count = sf_ref[0]
        l1_pen = sf_ref[1]
        l2_pen = sf_ref[2]
        pinball = jnp.sum(acc_ref[...]) * inv_count
        w = w_ref[...]
        l1 = jnp.sum(jnp.abs(w))
        l2 = jnp.sum(w * w)
        pen = jnp.where(c == 0, l1_pen * l1 + l2_pen * l2, 0.0)  # add once
        out_ref[...] = jnp.broadcast_to(pinball + pen, out_ref.shape)


# ---------------------------------------------------------------------------
# Tiling policy
# ---------------------------------------------------------------------------
def _lane_tile_cap():
    """Generation-aware lane-tile cap (multiple of 128).

    Cost per lane is ~128 B (preds + target blocks each pad to 8 sublanes,
    double-buffered): 64K lanes ~ 8 MiB (fits v5e's 16 MiB scoped-VMEM
    default), 128K lanes ~ 16 MiB (fits the 32 MiB default on v6e / v7x).
    """
    try:
        kind = jax.devices()[0].device_kind.lower()
    except Exception:
        return 65536
    if ("v6" in kind) or ("v7" in kind) or ("7x" in kind):
        return 131072
    return 65536


# ---------------------------------------------------------------------------
# Wrapper (layout plumbing + single pallas_call)
# ---------------------------------------------------------------------------
def quantile_loss(params, preds, target, quantiles, l1_pen=0.0, l2_pen=0.0, *,
                  preds_transposed=False, lane_tile=None):
    """Equivalent of QuantileLoss(quantiles, l1_pen, l2_pen)(model, preds, target).

    params: dict name->array; entries with 'weight' in the name are penalized.
    preds:  (N, Q), or (Q, N) if preds_transposed=True (avoids one HBM pass).
    target: (N,), (N, 1) or (N, Q).
    """
    preds = jnp.asarray(preds)
    target = jnp.asarray(target)

    if preds_transposed:
        q, n = preds.shape
        preds_t = preds                                  # already lane-dense
    else:
        n, q = preds.shape
        # TODO(synk): fuse this transpose into the producer (emit preds as (Q, N)).
        preds_t = preds.T                                # layout plumbing only

    if target.shape[0] != n or target.size not in (n, n * q):
        raise ValueError(f"target shape {target.shape} incompatible with N={n}, Q={q}")

    if target.ndim == 2 and target.shape == (n, q):
        tgt_t = target.T                                 # (Q, N)
        tr = q
    else:                                                # (N,) or (N, 1)
        tgt_t = target.reshape(1, n)
        tr = 1

    qv = jnp.asarray(quantiles, dtype=jnp.float32).reshape(q, 1)

    # Flatten + concat all penalized weights into one lane-dense block
    # (zero padding contributes 0 to both norms).
    w_list = [jnp.ravel(p).astype(jnp.float32)
              for name, p in params.items() if "weight" in name]
    w_flat = jnp.concatenate(w_list) if w_list else jnp.zeros((128,), jnp.float32)
    total = w_flat.shape[0]
    rw = -(-total // 128)
    w_flat = jnp.pad(w_flat, (0, rw * 128 - total)).reshape(rw, 128)

    # Lane tile: full-dim single tile if it fits the cap, else a 128-multiple
    # tile with in-kernel masking of the ragged tail (no jnp.pad copy).
    cap = int(lane_tile) if lane_tile is not None else _lane_tile_cap()
    if cap >= n:
        tn = n
    else:
        tn = max(128, (cap // 128) * 128)
        if tn >= n:
            tn = n
    t_total = -(-n // tn)            # number of logical lane tiles
    t_core = -(-t_total // 2)        # tiles per partition (2 partitions)

    # Runtime scalars in SMEM: changing the penalties does not recompile.
    sf = jnp.array([1.0 / float(n * q), float(l1_pen), float(l2_pen)],
                   dtype=jnp.float32)

    def _tile_map(c, i):
        # clamp the *fetch* index; the kernel masks by the logical index, so a
        # duplicated clamped tile contributes exactly 0.
        return (0, jnp.minimum(c * t_core + i, t_total - 1))

    kernel = functools.partial(_fused_quantile_loss_kernel, n=n)

    out = pl.pallas_call(
        kernel,
        out_shape=jax.ShapeDtypeStruct((2, 8, 128), jnp.float32),
        grid=(2, t_core),
        in_specs=[
            pl.BlockSpec(memory_space=pltpu.MemorySpace.SMEM),   # scalars
            pl.BlockSpec((q, 1), lambda c, i: (0, 0)),           # qv (resident)
            pl.BlockSpec((q, tn), _tile_map),                    # preds tiles
            pl.BlockSpec((tr, tn), _tile_map),                   # target tiles
            pl.BlockSpec((rw, 128), lambda c, i: (0, 0)),        # weights (resident)
        ],
        out_specs=pl.BlockSpec((1, 8, 128), lambda c, i: (c, 0, 0)),
        scratch_shapes=[pltpu.VMEM((q, 1), jnp.float32)],
        compiler_params=pltpu.CompilerParams(
            dimension_semantics=("parallel", "arbitrary")),
    )(sf, qv, preds_t, tgt_t, w_flat)

    # One tiny scalar add to combine the two per-partition partials.
    return out[0, 0, 0] + out[1, 0, 0]


# ---------------------------------------------------------------------------
# Pure-JAX reference (for correctness check)
# ---------------------------------------------------------------------------
def quantile_loss_ref(params, preds, target, quantiles, l1_pen, l2_pen):
    preds = jnp.asarray(preds, jnp.float32)
    target = jnp.asarray(target, jnp.float32)
    if target.ndim == 1:
        target = target[:, None]
    qv = jnp.asarray(quantiles, jnp.float32)[None, :]
    err = target - preds                                  # broadcasts like torch
    losses = jnp.maximum((qv - 1.0) * err, qv * err).mean(axis=0)
    loss = losses.mean()
    l1 = jnp.float32(0.0)
    l2 = jnp.float32(0.0)
    for name, p in params.items():
        if "weight" in name:
            l1 = l1 + jnp.sum(jnp.abs(p))
            l2 = l2 + jnp.sum(p * p)
    return loss + l1_pen * l1 + l2_pen * l2


if __name__ == "__main__":
    key = jax.random.PRNGKey(0)
    k1, k2, k3, k4, k5, k6, k7 = jax.random.split(key, 7)

    quantiles = [0.1, 0.25, 0.5, 0.75, 0.9]
    Q, D_in, H = len(quantiles), 16, 32

    # Synthetic "model": 2-layer MLP params (only 'weight' entries penalized,
    # mirroring the `if 'weight' in name` filter in the torch code).
    params = {
        "fc1.weight": jax.random.normal(k1, (H, D_in), jnp.float32) * 0.1,
        "fc1.bias": jnp.zeros((H,), jnp.float32),
        "fc2.weight": jax.random.normal(k2, (Q, H), jnp.float32) * 0.1,
        "fc2.bias": jnp.zeros((Q,), jnp.float32),
    }
    l1_pen, l2_pen = 0.01, 0.001

    # --- small test (single tile; second partition fully masked) -------------
    N = 8
    preds = jax.random.normal(k3, (N, Q), jnp.float32)
    target = jax.random.normal(k4, (N, 1), jnp.float32)   # broadcasts like torch
    loss = quantile_loss(params, preds, target, quantiles, l1_pen, l2_pen)
    jax.block_until_ready(loss)
    ref = quantile_loss_ref(params, preds, target, quantiles, l1_pen, l2_pen)
    assert np.allclose(np.asarray(loss), np.asarray(ref), rtol=1e-5, atol=1e-5), (
        float(loss), float(ref))

    # --- larger test, default (generation-aware) tiling ----------------------
    N2 = 20000
    preds2 = jax.random.normal(k5, (N2, Q), jnp.float32)
    target2 = jax.random.normal(k6, (N2, 1), jnp.float32)
    loss2 = quantile_loss(params, preds2, target2, quantiles, l1_pen, l2_pen)
    jax.block_until_ready(loss2)
    ref2 = quantile_loss_ref(params, preds2, target2, quantiles, l1_pen, l2_pen)
    assert np.allclose(np.asarray(loss2), np.asarray(ref2), rtol=1e-4, atol=1e-5), (
        float(loss2), float(ref2))

    # --- forced small lane tile: exercises the ragged-tail mask, the clamped
    #     out-of-range logical tile, multi-step accumulation and the 2-way
    #     "parallel" split ----------------------------------------------------
    loss3 = quantile_loss(params, preds2, target2, quantiles, l1_pen, l2_pen,
                          lane_tile=2048)
    jax.block_until_ready(loss3)
    assert np.allclose(np.asarray(loss3), np.asarray(ref2), rtol=1e-4, atol=1e-5), (
        float(loss3), float(ref2))

    # --- full (N, Q) target (equal-shape broadcasting, as torch allows) ------
    target4 = jax.random.normal(k7, (N2, Q), jnp.float32)
    loss4 = quantile_loss(params, preds2, target4, quantiles, l1_pen, l2_pen)
    jax.block_until_ready(loss4)
    ref4 = quantile_loss_ref(params, preds2, target4, quantiles, l1_pen, l2_pen)
    assert np.allclose(np.asarray(loss4), np.asarray(ref4), rtol=1e-4, atol=1e-5), (
        float(loss4), float(ref4))

    print("KERNEL_OK")
</pallas_src>

<mosaic_0001>
module attributes {stable_mosaic.version = 11 : i64} {
  func.func @_fused_quantile_loss_kernel(%arg0: i32, %arg1: i32, %arg2: memref<3xf32, #tpu.memory_space<smem>>, %arg3: memref<5x1xf32, #tpu.memory_space<vmem>>, %arg4: memref<5x8xf32, #tpu.memory_space<vmem>>, %arg5: memref<1x8xf32, #tpu.memory_space<vmem>>, %arg6: memref<6x128xf32, #tpu.memory_space<vmem>>, %arg7: memref<1x8x128xf32, #tpu.memory_space<vmem>>, %arg8: memref<5x1xf32, #tpu.memory_space<vmem>>) attributes {dimension_semantics = [#tpu.dimension_semantics<parallel>, #tpu.dimension_semantics<arbitrary>], iteration_bounds = array<i64: 2, 1>, scalar_prefetch = 0 : i64, scratch_operands = 1 : i64, tpu.core_type = #tpu.core_type<tc>, window_params = [{transform_indices = @transform_0, window_bounds = array<i64: 3>}, {pipeline_mode = #tpu.pipeline_mode<synchronous>, transform_indices = @transform_1, window_bounds = array<i64: 5, 1>}, {transform_indices = @transform_2, window_bounds = array<i64: 5, 8>}, {transform_indices = @transform_3, window_bounds = array<i64: 1, 8>}, {pipeline_mode = #tpu.pipeline_mode<synchronous>, transform_indices = @transform_4, window_bounds = array<i64: 6, 128>}, {transform_indices = @transform_5, window_bounds = array<i64: 1, 8, 128>}]} {
    %c0_i32 = arith.constant 0 : i32
    %0 = arith.cmpi eq, %arg1, %c0_i32 : i32
    %1 = arith.extui %0 : i1 to i32
    %c0_i32_0 = arith.constant 0 : i32
    %2 = arith.cmpi ne, %1, %c0_i32_0 : i32
    scf.if %2 {
      %cst_17 = arith.constant 0.000000e+00 : f32
      %36 = vector.broadcast %cst_17 : f32 to vector<5x1xf32>
      %c0_18 = arith.constant 0 : index
      %c0_19 = arith.constant 0 : index
      %37 = vector.load %arg8[%c0_18, %c0_19] : memref<5x1xf32, #tpu.memory_space<vmem>>, vector<5x1xf32>
      tpu.vector_store %arg8[%c0_18, %c0_19], %36 {strides = array<i32>} : memref<5x1xf32, #tpu.memory_space<vmem>>, vector<5x1xf32>,
    } else {
    }
    %c0 = arith.constant 0 : index
    %c0_1 = arith.constant 0 : index
    %3 = vector.load %arg3[%c0, %c0_1] : memref<5x1xf32, #tpu.memory_space<vmem>>, vector<5x1xf32>
    %c0_2 = arith.constant 0 : index
    %c0_3 = arith.constant 0 : index
    %4 = vector.load %arg4[%c0_2, %c0_3] : memref<5x8xf32, #tpu.memory_space<vmem>>, vector<5x8xf32>
    %c0_4 = arith.constant 0 : index
    %c0_5 = arith.constant 0 : index
    %5 = vector.load %arg5[%c0_4, %c0_5] : memref<1x8xf32, #tpu.memory_space<vmem>>, vector<1x8xf32>
    %c1_i32 = arith.constant 1 : i32
    %6 = arith.muli %arg0, %c1_i32 : i32
    %7 = arith.addi %6, %arg1 : i32
    %8 = tpu.iota {dimensions = array<i32: 1>} : vector<1x8xi32>
    %c8_i32 = arith.constant 8 : i32
    %9 = arith.muli %7, %c8_i32 : i32
    %10 = vector.broadcast %9 : i32 to vector<1x8xi32>
    %11 = arith.addi %10, %8 : vector<1x8xi32>
    %c8_i32_6 = arith.constant 8 : i32
    %12 = vector.broadcast %c8_i32_6 : i32 to vector<1x8xi32>
    %13 = arith.cmpi slt, %11, %12 : vector<1x8xi32>
    %14 = vector.broadcast %5 : vector<1x8xf32> to vector<5x8xf32>
    %15 = arith.subf %14, %4 : vector<5x8xf32>
    %cst = arith.constant 0.000000e+00 : f32
    %16 = vector.shape_cast %13 : vector<1x8xi1> to vector<1x8xi1>
    %17 = vector.broadcast %16 : vector<1x8xi1> to vector<5x8xi1>
    %18 = vector.broadcast %cst : f32 to vector<5x8xf32>
    %19 = arith.select %17, %15, %18 : vector<5x8xi1>, vector<5x8xf32>
    %cst_7 = arith.constant 0.000000e+00 : f32
    %20 = vector.broadcast %cst_7 : f32 to vector<5x8xf32>
    %21 = arith.subf %20, %19 : vector<5x8xf32>
    %cst_8 = arith.constant 0.000000e+00 : f32
    %22 = vector.broadcast %cst_8 : f32 to vector<5x8xf32>
    %23 = arith.maximumf %21, %22 : vector<5x8xf32>
    %cst_9 = arith.constant dense<0.000000e+00> : vector<5xf32>
    %24 = vector.multi_reduction <add>, %19, %cst_9 [1] : vector<5x8xf32> to vector<5xf32>
    %25 = vector.shape_cast %24 : vector<5xf32> to vector<5x1xf32>
    %cst_10 = arith.constant dense<0.000000e+00> : vector<5xf32>
    %26 = vector.multi_reduction <add>, %23, %cst_10 [1] : vector<5x8xf32> to vector<5xf32>
    %27 = vector.shape_cast %26 : vector<5xf32> to vector<5x1xf32>
    %c0_11 = arith.constant 0 : index
    %c0_12 = arith.constant 0 : index
    %28 = vector.load %arg8[%c0_11, %c0_12] : memref<5x1xf32, #tpu.memory_space<vmem>>, vector<5x1xf32>
    %29 = arith.mulf %3, %25 : vector<5x1xf32>
    %30 = arith.addf %29, %27 : vector<5x1xf32>
    %31 = arith.addf %28, %30 : vector<5x1xf32>
    %c0_13 = arith.constant 0 : index
    %c0_14 = arith.constant 0 : index
    %32 = vector.load %arg8[%c0_13, %c0_14] : memref<5x1xf32, #tpu.memory_space<vmem>>, vector<5x1xf32>
    tpu.vector_store %arg8[%c0_13, %c0_14], %31 {strides = array<i32>} : memref<5x1xf32, #tpu.memory_space<vmem>>, vector<5x1xf32>,
    %c0_i32_15 = arith.constant 0 : i32
    %33 = arith.cmpi eq, %arg1, %c0_i32_15 : i32
    %34 = arith.extui %33 : i1 to i32
    %c0_i32_16 = arith.constant 0 : i32
    %35 = arith.cmpi ne, %34, %c0_i32_16 : i32
    scf.if %35 {
      %c0_17 = arith.constant 0 : index
      %36 = memref.load %arg2[%c0_17] : memref<3xf32, #tpu.memory_space<smem>>
      %c1 = arith.constant 1 : index
      %37 = memref.load %arg2[%c1] : memref<3xf32, #tpu.memory_space<smem>>
      %c2 = arith.constant 2 : index
      %38 = memref.load %arg2[%c2] : memref<3xf32, #tpu.memory_space<smem>>
      %c0_18 = arith.constant 0 : index
      %c0_19 = arith.constant 0 : index
      %39 = vector.load %arg8[%c0_18, %c0_19] : memref<5x1xf32, #tpu.memory_space<vmem>>, vector<5x1xf32>
      %40 = vector.shape_cast %39 : vector<5x1xf32> to vector<1x5x1xf32>
      %cst_20 = arith.constant dense<0.000000e+00> : vector<1xf32>
      %41 = vector.multi_reduction <add>, %40, %cst_20 [1, 2] : vector<1x5x1xf32> to vector<1xf32>
      %42 = vector.shape_cast %41 : vector<1xf32> to vector<1x1x1xf32>
      %43 = vector.extract %42[0, 0, 0] : f32 from vector<1x1x1xf32>
      %44 = arith.mulf %43, %36 : f32
      %c0_21 = arith.constant 0 : index
      %c0_22 = arith.constant 0 : index
      %45 = vector.load %arg6[%c0_21, %c0_22] : memref<6x128xf32, #tpu.memory_space<vmem>>, vector<6x128xf32>
      %46 = math.absf %45 : vector<6x128xf32>
      %47 = vector.shape_cast %46 : vector<6x128xf32> to vector<1x6x128xf32>
      %cst_23 = arith.constant dense<0.000000e+00> : vector<1xf32>
      %48 = vector.multi_reduction <add>, %47, %cst_23 [1, 2] : vector<1x6x128xf32> to vector<1xf32>
      %49 = vector.shape_cast %48 : vector<1xf32> to vector<1x1x1xf32>
      %50 = vector.extract %49[0, 0, 0] : f32 from vector<1x1x1xf32>
      %51 = arith.mulf %45, %45 : vector<6x128xf32>
      %52 = vector.shape_cast %51 : vector<6x128xf32> to vector<1x6x128xf32>
      %cst_24 = arith.constant dense<0.000000e+00> : vector<1xf32>
      %53 = vector.multi_reduction <add>, %52, %cst_24 [1, 2] : vector<1x6x128xf32> to vector<1xf32>
      %54 = vector.shape_cast %53 : vector<1xf32> to vector<1x1x1xf32>
      %55 = vector.extract %54[0, 0, 0] : f32 from vector<1x1x1xf32>
      %c0_i32_25 = arith.constant 0 : i32
      %56 = arith.cmpi eq, %arg0, %c0_i32_25 : i32
      %57 = arith.mulf %37, %50 : f32
      %58 = arith.mulf %38, %55 : f32
      %59 = arith.addf %57, %58 : f32
      %cst_26 = arith.constant 0.000000e+00 : f32
      %60 = arith.select %56, %59, %cst_26 : f32
      %61 = arith.addf %44, %60 : f32
      %62 = vector.broadcast %61 : f32 to vector<1x8x128xf32>
      %c0_27 = arith.constant 0 : index
      %c0_28 = arith.constant 0 : index
      %c0_29 = arith.constant 0 : index
      %63 = vector.load %arg7[%c0_27, %c0_28, %c0_29] : memref<1x8x128xf32, #tpu.memory_space<vmem>>, vector<1x8x128xf32>
      tpu.vector_store %arg7[%c0_27, %c0_28, %c0_29], %62 {strides = array<i32>} : memref<1x8x128xf32, #tpu.memory_space<vmem>>, vector<1x8x128xf32>,
    } else {
    }
    return
  }
  func.func @transform_0(%arg0: i32, %arg1: i32) -> i32 {
    %c0_i32 = arith.constant 0 : i32
    %c0_i32_0 = arith.constant 0 : i32
    return %c0_i32 : i32
  }
  func.func @transform_1(%arg0: i32, %arg1: i32) -> (i32, i32) {
    %c0_i32 = arith.constant 0 : i32
    %c0_i32_0 = arith.constant 0 : i32
    %c0_i32_1 = arith.constant 0 : i32
    return %c0_i32, %c0_i32_0 : i32, i32
  }
  func.func @transform_2(%arg0: i32, %arg1: i32) -> (i32, i32) {
    %c1_i32 = arith.constant 1 : i32
    %0 = arith.muli %arg0, %c1_i32 : i32
    %1 = arith.addi %0, %arg1 : i32
    %c0_i32 = arith.constant 0 : i32
    %2 = arith.minsi %1, %c0_i32 : i32
    %c0_i32_0 = arith.constant 0 : i32
    %c0_i32_1 = arith.constant 0 : i32
    return %c0_i32_0, %2 : i32, i32
  }
  func.func @transform_3(%arg0: i32, %arg1: i32) -> (i32, i32) {
    %c1_i32 = arith.constant 1 : i32
    %0 = arith.muli %arg0, %c1_i32 : i32
    %1 = arith.addi %0, %arg1 : i32
    %c0_i32 = arith.constant 0 : i32
    %2 = arith.minsi %1, %c0_i32 : i32
    %c0_i32_0 = arith.constant 0 : i32
    %c0_i32_1 = arith.constant 0 : i32
    return %c0_i32_0, %2 : i32, i32
  }
  func.func @transform_4(%arg0: i32, %arg1: i32) -> (i32, i32) {
    %c0_i32 = arith.constant 0 : i32
    %c0_i32_0 = arith.constant 0 : i32
    %c0_i32_1 = arith.constant 0 : i32
    return %c0_i32, %c0_i32_0 : i32, i32
  }
  func.func @transform_5(%arg0: i32, %arg1: i32) -> (i32, i32, i32) {
    %c0_i32 = arith.constant 0 : i32
    %c0_i32_0 = arith.constant 0 : i32
    %c0_i32_1 = arith.constant 0 : i32
    return %arg0, %c0_i32, %c0_i32_0 : i32, i32, i32
  }
}

</mosaic_0001>

<llo_original>
// kernel: tpu_custom_call.1
$region0: #{tpu_custom_call.1}
  #allocation0 [shape = 'u32[]', space=smem, size = 0x4, offset = 0x4, fixed_abs, tag = 'smem constant byte address 0x4 - core index']
  #allocation1 [shape = 'u32[72,128]{1,0:T(1,128)}', space=vmem, size = 0x9000, scoped, tag = 'internal scratch']
  #allocation2 [shape = 'f32[5,1]{1,0:T(8,128)}', space=vmem, size = 0x1000, scoped, tag = 'scratch operand']
  %s0 = inlined_call_operand.vmem [shape: f32[3], index: 0, kind: input, shape index: {}]
  %s1 = inlined_call_operand.vmem [shape: f32[5,1], index: 1, kind: input, shape index: {}]
  %s2 = inlined_call_operand.vmem [shape: f32[5,8], index: 2, kind: input, shape index: {}]
  %s3 = inlined_call_operand.vmem [shape: f32[1,8], index: 3, kind: input, shape index: {}]
  %s4 = inlined_call_operand.hbm [shape: f32[6,128], index: 4, kind: input, shape index: {}]
  %s5 = inlined_call_operand.hbm [shape: f32[2,8,128], index: 5, kind: output, shape index: {}]
  %s6 = sld [smem:[#allocation0]]
  $region69: #{tpu_custom_call.1} parent=0
    _
  %s8 = ssub.s32 1, %s6
  %s9 = scalar_select 0, %s8, %s6
  $region1: #{tpu_custom_call.1} parent=0
    #allocation3 [shape = 'u8[512]{0}', space=smem, size = 0x200, scoped, tag = 'input window, operand 0, single buffered']
    #allocation4 [shape = 's32[2]{0}', space=sflag, size = 0x8, scoped, tag = 'scoped memory for tpu_custom_call.1']
    #allocation5 [shape = 's32[2]{0}', space=sflag, size = 0x8, scoped, tag = 'scoped memory for tpu_custom_call.1']
    #allocation6 [shape = 's32[2]{0}', space=sflag, size = 0x8, scoped, tag = 'scoped memory for tpu_custom_call.1']
    #allocation7 [shape = 'u8[4096]{0}', space=vmem, size = 0x1000, scoped, tag = 'input window, operand 4, single buffered']
    #allocation8 [shape = 'u8[8192]{0}', space=vmem, size = 0x2000, scoped, tag = 'output window, operand 0']
    %10 = vsyncpa [#allocation6], 0
    %11 = vsyncpa [#allocation4], 0
    %12 = vsyncpa [#allocation5], 0
    %s13 = scalar_lea.sflag [#allocation5], 1
    %14 = vsyncpa %s13, 0
    loop: start=0, step=1, limit=4
    $region2: #{tpu_custom_call.1} parent=1 // loop_pre_header
      _
    $region3: #{tpu_custom_call.1} parent=1 // loop_header
      %s16 = sphi 0, %s20
      %p17 = scmp.ge.s32.totalorder %s16, 4
      %s23 = sphi 0, %s35
      %s24 = sphi 0, %s31
      %s25 = sphi 0, %s23
      %s26 = sphi 0, %s24
      %s27 = sphi 0, %s25
      %s28 = sphi 0, %s26
      %s36 = sphi 0, %s36
      %s38 = sphi 0, %s36
      %s39 = sphi 0, %s38
      %s53 = sphi 0, %s39
      %s57 = sphi 0, %s57
      %s59 = sphi 0, %s57
      %s60 = sphi 0, %s59
      %s74 = sphi 0, %s60
      %s86 = sphi 0, %s88
      %s89 = sphi 0, %s86
      %s90 = sphi 0, %s89
      %s106 = sphi 0, %s90
      %s118 = sphi 0, %s120
      %s121 = sphi 0, %s118
      %s122 = sphi 0, %s121
      %s138 = sphi 0, %s122
      %s142 = sphi 0, %s142
      %s144 = sphi 0, %s142
      %s145 = sphi 0, %s144
      %s159 = sphi 0, %s145
      %s165 = sphi 0, %s167
      %s168 = sphi 0, %s165
      %s169 = sphi 0, %s168
      %s185 = sphi 0, %s169
    $region4: #{tpu_custom_call.1} parent=1 // loop_header_branch
      %19 = sbr.rel (%p17) target = $region8
    $region5: #{tpu_custom_call.1} parent=1 // loop_body
      %s21 = ssub.s32 %s16, 1
      %s22 = ssub.s32 %s16, 2
      %s29 = sadd.s32 1, %s24
      %p30 = scmp.ge.s32.totalorder %s29, 1
      %s31 = scalar_select %p30, 0, %s29
      %s32 = sadd.s32 1, %s23
      %s33 = scalar_select %p30, %s32, %s23
      %p34 = scmp.ge.s32.totalorder %s33, 2
      %s35 = scalar_select %p34, 0, %s33
      %s37 = sadd.s32 %s36, 1
      %p40 = scmp.eq.s32.totalorder %s16, 1
      %p41 = scmp.ne.s32.totalorder %s36, %s38
      %p42 = scmp.eq.s32.totalorder %s16, 0
      %p43 = por %p41, %p42
      %p44 = scmp.ne.s32.totalorder %s36, %s38
      %p45 = scmp.eq.s32.totalorder %s21, 1
      %p46 = por %p44, %p45
      %p47 = scmp.ne.s32.totalorder %s38, %s39
      %p48 = scmp.eq.s32.totalorder %s21, 0
      %p49 = por %p47, %p48
      %p50 = scmp.ne.s32.totalorder %s38, %s39
      %p51 = scmp.eq.s32.totalorder %s22, 1
      %p52 = por %p50, %p51
      %p54 = scmp.ne.s32.totalorder %s39, %s53
      %p55 = scmp.eq.s32.totalorder %s22, 0
      %p56 = por %p54, %p55
      %s58 = sadd.s32 %s57, 1
      %p61 = scmp.eq.s32.totalorder %s16, 1
      %p62 = scmp.ne.s32.totalorder %s57, %s59
      %p63 = scmp.eq.s32.totalorder %s16, 0
      %p64 = por %p62, %p63
      %p65 = scmp.ne.s32.totalorder %s57, %s59
      %p66 = scmp.eq.s32.totalorder %s21, 1
      %p67 = por %p65, %p66
      %p68 = scmp.ne.s32.totalorder %s59, %s60
      %p69 = scmp.eq.s32.totalorder %s21, 0
      %p70 = por %p68, %p69
      %p71 = scmp.ne.s32.totalorder %s59, %s60
      %p72 = scmp.eq.s32.totalorder %s22, 1
      %p73 = por %p71, %p72
      %p75 = scmp.ne.s32.totalorder %s60, %s74
      %p76 = scmp.eq.s32.totalorder %s22, 0
      %p77 = por %p75, %p76
      %s78 = sadd.s32 %s23, %s24
      %p79 = scmp.lt.s32.totalorder %s78, 0
      %s80 = scalar_select %p79, %s78, 0
      %s81 = sadd.s32 %s35, %s31
      %p82 = scmp.lt.s32.totalorder %s81, 0
      %s83 = scalar_select %p82, %s81, 0
      %s84 = ssub.s32 %s80, %s83
      %p85 = scmp.eq.s32.totalorder %s84, 0
      %s87 = sadd.s32 %s86, 1
      %s88 = scalar_select %p85, %s86, %s87
      %p91 = pneg %p85
      %p92 = scmp.eq.s32.totalorder %s16, 1
      %p93 = por %p91, %p92
      %p94 = scmp.ne.s32.totalorder %s86, %s89
      %p95 = scmp.eq.s32.totalorder %s16, 0
      %p96 = por %p94, %p95
      %p97 = scmp.ne.s32.totalorder %s86, %s89
      %p98 = scmp.eq.s32.totalorder %s21, 1
      %p99 = por %p97, %p98
      %p100 = scmp.ne.s32.totalorder %s89, %s90
      %p101 = scmp.eq.s32.totalorder %s21, 0
      %p102 = por %p100, %p101
      %p103 = scmp.ne.s32.totalorder %s89, %s90
      %p104 = scmp.eq.s32.totalorder %s22, 1
      %p105 = por %p103, %p104
      %p107 = scmp.ne.s32.totalorder %s90, %s106
      %p108 = scmp.eq.s32.totalorder %s22, 0
      %p109 = por %p107, %p108
      %s110 = sadd.s32 %s23, %s24
      %p111 = scmp.lt.s32.totalorder %s110, 0
      %s112 = scalar_select %p111, %s110, 0
      %s113 = sadd.s32 %s35, %s31
      %p114 = scmp.lt.s32.totalorder %s113, 0
      %s115 = scalar_select %p114, %s113, 0
      %s116 = ssub.s32 %s112, %s115
      %p117 = scmp.eq.s32.totalorder %s116, 0
      %s119 = sadd.s32 %s118, 1
      %s120 = scalar_select %p117, %s118, %s119
      %p123 = pneg %p117
      %p124 = scmp.eq.s32.totalorder %s16, 1
      %p125 = por %p123, %p124
      %p126 = scmp.ne.s32.totalorder %s118, %s121
      %p127 = scmp.eq.s32.totalorder %s16, 0
      %p128 = por %p126, %p127
      %p129 = scmp.ne.s32.totalorder %s118, %s121
      %p130 = scmp.eq.s32.totalorder %s21, 1
      %p131 = por %p129, %p130
      %p132 = scmp.ne.s32.totalorder %s121, %s122
      %p133 = scmp.eq.s32.totalorder %s21, 0
      %p134 = por %p132, %p133
      %p135 = scmp.ne.s32.totalorder %s121, %s122
      %p136 = scmp.eq.s32.totalorder %s22, 1
      %p137 = por %p135, %p136
      %p139 = scmp.ne.s32.totalorder %s122, %s138
      %p140 = scmp.eq.s32.totalorder %s22, 0
      %p141 = por %p139, %p140
      %s143 = sadd.s32 %s142, 1
      %p146 = scmp.eq.s32.totalorder %s16, 1
      %p147 = scmp.ne.s32.totalorder %s142, %s144
      %p148 = scmp.eq.s32.totalorder %s16, 0
      %p149 = por %p147, %p148
      %p150 = scmp.ne.s32.totalorder %s142, %s144
      %p151 = scmp.eq.s32.totalorder %s21, 1
      %p152 = por %p150, %p151
      %p153 = scmp.ne.s32.totalorder %s144, %s145
      %p154 = scmp.eq.s32.totalorder %s21, 0
      %p155 = por %p153, %p154
      %p156 = scmp.ne.s32.totalorder %s144, %s145
      %p157 = scmp.eq.s32.totalorder %s22, 1
      %p158 = por %p156, %p157
      %p160 = scmp.ne.s32.totalorder %s145, %s159
      %p161 = scmp.eq.s32.totalorder %s22, 0
      %p162 = por %p160, %p161
      %s163 = ssub.s32 %s23, %s35
      %p164 = scmp.eq.s32.totalorder %s163, 0
      %s166 = sadd.s32 %s165, 1
      %s167 = scalar_select %p164, %s165, %s166
      %p170 = pneg %p164
      %p171 = scmp.eq.s32.totalorder %s16, 1
      %p172 = por %p170, %p171
      %p173 = scmp.ne.s32.totalorder %s165, %s168
      %p174 = scmp.eq.s32.totalorder %s16, 0
      %p175 = por %p173, %p174
      %p176 = scmp.ne.s32.totalorder %s165, %s168
      %p177 = scmp.eq.s32.totalorder %s21, 1
      %p178 = por %p176, %p177
      %p179 = scmp.ne.s32.totalorder %s168, %s169
      %p180 = scmp.eq.s32.totalorder %s21, 0
      %p181 = por %p179, %p180
      %p182 = scmp.ne.s32.totalorder %s168, %s169
      %p183 = scmp.eq.s32.totalorder %s22, 1
      %p184 = por %p182, %p183
      %p186 = scmp.ne.s32.totalorder %s169, %s185
      %p187 = scmp.eq.s32.totalorder %s22, 0
      %p188 = por %p186, %p187
      %p189 = scmp.le.s32.totalorder 1, %s16
      %p190 = scmp.lt.s32.totalorder %s16, 3
      %p191 = pnand %p189, %p190
      %p192 = pneg %p191
      // Predicated region
      $region9: #{tpu_custom_call.1} parent=5 // pred_check
        _
      $region10: #{tpu_custom_call.1} parent=5 // pred_check_branch
        %194 = sbr.rel (%p191) target = $region12
      $region11: #{tpu_custom_call.1} parent=5 // pred_region
        %s195 = ssub.s32 %s16, 1
        // Predicated region
        $region13: #{tpu_custom_call.1} parent=11 // pred_check
          %p196 = pneg %p49
        $region14: #{tpu_custom_call.1} parent=11 // pred_check_branch
          %198 = sbr.rel (%p196) target = $region16
        $region15: #{tpu_custom_call.1} parent=11 // pred_region
          %200 = vsyncadd [#allocation6], 0
          %s202 = sshll.u32 %s0, 4
          %s203 = int_to_ptr.vmem [resolvable:$true] %s202
          %205 = dma.vmem_to_smem %s203, 16, [#allocation3], [#allocation6]
        $region16: #{tpu_custom_call.1} parent=11 // pred_fallthru
          _
        // Predicated region
        $region17: #{tpu_custom_call.1} parent=11 // pred_check
          %p206 = pneg %p70
        $region18: #{tpu_custom_call.1} parent=11 // pred_check_branch
          %208 = sbr.rel (%p206) target = $region20
        $region19: #{tpu_custom_call.1} parent=11 // pred_region
          _
        $region20: #{tpu_custom_call.1} parent=11 // pred_fallthru
          _
        // Predicated region
        $region21: #{tpu_custom_call.1} parent=11 // pred_check
          %p209 = pneg %p155
        $region22: #{tpu_custom_call.1} parent=11 // pred_check_branch
          %211 = sbr.rel (%p209) target = $region24
        $region23: #{tpu_custom_call.1} parent=11 // pred_region
          %213 = vsyncadd [#allocation4], 0
          %s215 = sshll.u32 %s4, 4
          %s216 = int_to_ptr.hbm [resolvable:$true] %s215
          %s217 = sshll.u32 [#allocation7], 4
          %s218 = int_to_ptr.vmem [resolvable:$true] %s217
          %220 = dma.hbm_to_vmem [thread:$0]  %s216, 128, %s218, [#allocation4]
        $region24: #{tpu_custom_call.1} parent=11 // pred_fallthru
          _
      $region12: #{tpu_custom_call.1} parent=5 // pred_fallthru
        _
      %p221 = scmp.lt.s32.totalorder %s16, 2
      // Predicated region
      $region25: #{tpu_custom_call.1} parent=5 // pred_check
        %p222 = pneg %p221
      $region26: #{tpu_custom_call.1} parent=5 // pred_check_branch
        %224 = sbr.rel (%p222) target = $region28
      $region27: #{tpu_custom_call.1} parent=5 // pred_region
        // Predicated region
        $region29: #{tpu_custom_call.1} parent=27 // pred_check
          %p225 = pneg %p96
        $region30: #{tpu_custom_call.1} parent=27 // pred_check_branch
          %227 = sbr.rel (%p225) target = $region32
        $region31: #{tpu_custom_call.1} parent=27 // pred_region
          %s228 = sadd.s32 %s23, %s24
          %p229 = scmp.lt.s32.totalorder %s228, 0
          %s230 = scalar_select %p229, %s228, 0
          %p231 = scmp.lt.s32.totalorder %s230, 0
          %s232 = scalar_select %p231, %s230, 0
          %s233 = smul.addr %s232, 8
          %s234 = scalar_lea.vmem %s2, %s233
          %s235 = sadd.s32 %s23, %s24
          %p236 = scmp.lt.s32.totalorder %s235, 0
          %s237 = scalar_select %p236, %s235, 0
        $region32: #{tpu_custom_call.1} parent=27 // pred_fallthru
          _
        // Predicated region
        $region33: #{tpu_custom_call.1} parent=27 // pred_check
          %p238 = pneg %p128
        $region34: #{tpu_custom_call.1} parent=27 // pred_check_branch
          %240 = sbr.rel (%p238) target = $region36
        $region35: #{tpu_custom_call.1} parent=27 // pred_region
          %s241 = sadd.s32 %s23, %s24
          %p242 = scmp.lt.s32.totalorder %s241, 0
          %s243 = scalar_select %p242, %s241, 0
          %p244 = scmp.lt.s32.totalorder %s243, 0
          %s245 = scalar_select %p244, %s243, 0
          %s246 = scalar_lea.vmem %s3, %s245
          %s247 = sadd.s32 %s23, %s24
          %p248 = scmp.lt.s32.totalorder %s247, 0
          %s249 = scalar_select %p248, %s247, 0
        $region36: #{tpu_custom_call.1} parent=27 // pred_fallthru
          _
      $region28: #{tpu_custom_call.1} parent=5 // pred_fallthru
        _
      %p250 = scmp.le.s32.totalorder 1, %s16
      %p251 = scmp.lt.s32.totalorder %s16, 3
      %p252 = pnand %p250, %p251
      %p253 = pneg %p252
      // Predicated region
      $region37: #{tpu_custom_call.1} parent=5 // pred_check
        _
      $region38: #{tpu_custom_call.1} parent=5 // pred_check_branch
        %255 = sbr.rel (%p252) target = $region40
      $region39: #{tpu_custom_call.1} parent=5 // pred_region
        %s256 = ssub.s32 %s16, 1
        // Predicated region
        $region41: #{tpu_custom_call.1} parent=39 // pred_check
          %p257 = pneg %p49
        $region42: #{tpu_custom_call.1} parent=39 // pred_check_branch
          %259 = sbr.rel (%p257) target = $region44
        $region43: #{tpu_custom_call.1} parent=39 // pred_region
          %261 = dma.done [#allocation6], 16
        $region44: #{tpu_custom_call.1} parent=39 // pred_fallthru
          _
        // Predicated region
        $region45: #{tpu_custom_call.1} parent=39 // pred_check
          %p262 = pneg %p155
        $region46: #{tpu_custom_call.1} parent=39 // pred_check_branch
          %264 = sbr.rel (%p262) target = $region48
        $region47: #{tpu_custom_call.1} parent=39 // pred_region
          %266 = dma.done [#allocation4], 128
        $region48: #{tpu_custom_call.1} parent=39 // pred_fallthru
          _
        %267 = sfence
        %p268 = pneg %p49
        %p269 = pneg %p46
        %p270 = pneg %p70
        %p271 = pneg %p67
        %s272 = sadd.s32 %s25, %s26
        %p273 = scmp.lt.s32.totalorder %s272, 0
        %s274 = scalar_select %p273, %s272, 0
        %p275 = scmp.lt.s32.totalorder %s274, 0
        %s276 = scalar_select %p275, %s274, 0
        %s277 = smul.addr %s276, 8
        %s278 = scalar_lea.vmem %s2, %s277
        %p279 = pneg %p102
        %p280 = pneg %p99
        %s281 = sadd.s32 %s25, %s26
        %p282 = scmp.lt.s32.totalorder %s281, 0
        %s283 = scalar_select %p282, %s281, 0
        %p284 = scmp.lt.s32.totalorder %s283, 0
        %s285 = scalar_select %p284, %s283, 0
        %s286 = scalar_lea.vmem %s3, %s285
        %p287 = pneg %p134
        %p288 = pneg %p131
        %p289 = pneg %p155
        %p290 = pneg %p152
        %p291 = pneg %p181
        %p292 = pneg %p178
        %s293 = sand.u32 %s168, 1
        %s294 = scalar_lea.sflag [#allocation5], %s293
        %s295 = sand.u32 %s168, 1
        %s296 = smul.addr %s295, 8
        %s297 = scalar_lea.vmem [#allocation8], %s296
        %s298 = sadd.s32 %s25, %s26
        %p299 = scmp.lt.s32.totalorder %s298, 0
        %s300 = scalar_select %p299, %s298, 0
        %p301 = scmp.lt.s32.totalorder %s300, 0
        %s302 = scalar_select %p301, %s300, 0
        %s303 = smul.addr %s302, 8
        %s304 = scalar_lea.vmem %s2, %s303
        %s305 = sadd.s32 %s25, %s26
        %p306 = scmp.lt.s32.totalorder %s305, 0
        %s307 = scalar_select %p306, %s305, 0
        %s308 = sadd.s32 %s25, %s26
        %p309 = scmp.lt.s32.totalorder %s308, 0
        %s310 = scalar_select %p309, %s308, 0
        %p311 = scmp.lt.s32.totalorder %s310, 0
        %s312 = scalar_select %p311, %s310, 0
        %s313 = scalar_lea.vmem %s3, %s312
        %s314 = sadd.s32 %s25, %s26
        %p315 = scmp.lt.s32.totalorder %s314, 0
        %s316 = scalar_select %p315, %s314, 0
        %p317 = scmp.eq.s32.totalorder %s26, 0
        // Predicated region
        $region49: #{tpu_custom_call.1} parent=39 // pred_check
          %p318 = pneg %p317
        $region50: #{tpu_custom_call.1} parent=39 // pred_check_branch
          %320 = sbr.rel (%p318) target = $region52
        $region51: #{tpu_custom_call.1} parent=39 // pred_region
          %vm321 = vcmask 4096
          %322 = vst.msk [vmem:[#allocation2] sm:$0x1f] %vm321, 0.0
        $region52: #{tpu_custom_call.1} parent=39 // pred_fallthru
          _
        %v323 = vld [vmem:[%s1] sm:$0x1f]
        %v324 = vld [vmem:[%s304] sm:$0x1f]
        %v325 = vld [vmem:[%s313] sm:$0x1]
        %s326 = sadd.s32 %s25, %s26
        %v327 = vlaneseq
        %v328 = vand.u32 %v327, 127
        %s329 = smul.u32 %s326, 8
        %v330 = vstv %s329
        %v331 = vadd.s32 %v330, %v328
        %vm332 = vcmp.lt.s32.totalorder %v331, 8
        %v334 = vperm.slane %v325, 0
        %v336 = vsub.f32 %v334, %v324
        %v337 = vsel %vm332, 1, 0
        %vm338 = vcmp.eq.s32.totalorder %v337, 1
        %v339 = vsel %vm338, %v336, 0.0
        %v340 = vsub.f32 0.0, %v339
        %v341 = vmax.f32 %v340, 0.0
        %vm342 = vcmask 61440
        %v343 = vsel %vm342, %v339, 0.0
        %344 = vadd.xlane.f32.xlu0 %v343
        %v345 = vpop.xlane.xlu0 %344
        %v346 = vsel %vm342, %v341, 0.0
        %347 = vadd.xlane.f32.xlu0 %v346
        %v348 = vpop.xlane.xlu0 %347
        %v349 = vld [vmem:[#allocation2] sm:$0x1f]
        %v350 = vmul.f32 %v323, %v345
        %v351 = vadd.f32 %v350, %v348
        %v352 = vadd.f32 %v349, %v351
        %vm353 = vcmask 4096
        %354 = vst.msk [vmem:[#allocation2] sm:$0x1f] %vm353, %v352
        // Predicated region
        $region53: #{tpu_custom_call.1} parent=39 // pred_check
          %p355 = pneg %p317
        $region54: #{tpu_custom_call.1} parent=39 // pred_check_branch
          %357 = sbr.rel (%p355) target = $region56
        $region55: #{tpu_custom_call.1} parent=39 // pred_region
          %s358 = sld [smem:[#allocation3]]
          %s359 = sld [smem:[#allocation3 + $0x1]]
          %s360 = sld [smem:[#allocation3 + $0x2]]
          %v361 = vld [vmem:[#allocation2] sm:$0x1f]
          %v362 = vsel %vm353, %v361, 0.0
          %363 = vadd.xlane.f32.xlu0 %v362
          %v364 = vpop.xlane.xlu0 %363
          %v365 = vrot.slane %v364, 4
          %v366 = vadd.f32 %v364, %v365
          %v367 = vrot.slane %v366, 2
          %v368 = vadd.f32 %v366, %v367
          %v369 = vrot.slane %v368, 1
          %v370 = vadd.f32 %v368, %v369
          %s371 = vtos %v370
          %s372 = smul.f32 %s371, %s358
          %v373 = vld [vmem:[#allocation7] sm:$0x3f]
          %v374 = vand.u32 2147483647, %v373
          %vm375 = vcmask 1045504
          %v376 = vsel %vm375, %v374, 0.0
          %377 = vadd.xlane.f32.xlu0 %v376
          %v378 = vpop.xlane.xlu0 %377
          %v379 = vrot.slane %v378, 4
          %v380 = vadd.f32 %v378, %v379
          %v381 = vrot.slane %v380, 2
          %v382 = vadd.f32 %v380, %v381
          %v383 = vrot.slane %v382, 1
          %v384 = vadd.f32 %v382, %v383
          %s385 = vtos %v384
          %v386 = vmul.f32 %v373, %v373
          %v387 = vsel %vm375, %v386, 0.0
          %388 = vadd.xlane.f32.xlu0 %v387
          %v389 = vpop.xlane.xlu0 %388
          %v390 = vrot.slane %v389, 4
          %v391 = vadd.f32 %v389, %v390
          %v392 = vrot.slane %v391, 2
          %v393 = vadd.f32 %v391, %v392
          %v394 = vrot.slane %v393, 1
          %v395 = vadd.f32 %v393, %v394
          %s396 = vtos %v395
          %p397 = scmp.eq.s32.totalorder %s25, 0
          %s398 = smul.f32 %s359, %s385
          %s399 = smul.f32 %s360, %s396
          %s400 = sadd.f32 %s398, %s399
          %s401 = scalar_select %p397, %s400, 0.0
          %s402 = sadd.f32 %s372, %s401
          %v403 = vstv %s402
          %404 = vst [vmem:[%s297] sm:$0xff] %v403
        $region56: #{tpu_custom_call.1} parent=39 // pred_fallthru
          _
        %s405 = sand.u32 %s168, 1
        %s406 = scalar_lea.sflag [#allocation5], %s405
        %s407 = sand.u32 %s168, 1
        %s408 = smul.addr %s407, 8
        %s409 = scalar_lea.vmem [#allocation8], %s408
        // Predicated region
        $region57: #{tpu_custom_call.1} parent=39 // pred_check
          %p410 = pneg %p178
        $region58: #{tpu_custom_call.1} parent=39 // pred_check_branch
          %412 = sbr.rel (%p410) target = $region60
        $region59: #{tpu_custom_call.1} parent=39 // pred_region
          %414 = vsyncadd %s406, 0
          %s415 = smul.addr %s25, 8
          %s416 = scalar_lea.hbm %s5, %s415
          %s418 = sshll.u32 %s409, 4
          %s419 = int_to_ptr.vmem [resolvable:$true] %s418
          %s420 = sshll.u32 %s416, 4
          %s421 = int_to_ptr.hbm [resolvable:$true] %s420
          %423 = dma.vmem_to_hbm [thread:$0]  %s419, 128, %s421, %s406
        $region60: #{tpu_custom_call.1} parent=39 // pred_fallthru
          _
      $region40: #{tpu_custom_call.1} parent=5 // pred_fallthru
        _
      %p424 = scmp.le.s32.totalorder 2, %s16
      // Predicated region
      $region61: #{tpu_custom_call.1} parent=5 // pred_check
        %p425 = pneg %p424
      $region62: #{tpu_custom_call.1} parent=5 // pred_check_branch
        %427 = sbr.rel (%p425) target = $region64
      $region63: #{tpu_custom_call.1} parent=5 // pred_region
        %s428 = ssub.s32 %s16, 2
        // Predicated region
        $region65: #{tpu_custom_call.1} parent=63 // pred_check
          %p429 = pneg %p184
        $region66: #{tpu_custom_call.1} parent=63 // pred_check_branch
          %431 = sbr.rel (%p429) target = $region68
        $region67: #{tpu_custom_call.1} parent=63 // pred_region
          %s432 = sand.u32 %s169, 1
          %s433 = scalar_lea.sflag [#allocation5], %s432
          %s434 = sand.u32 %s169, 1
          %s435 = smul.addr %s434, 8
          %s436 = scalar_lea.vmem [#allocation8], %s435
          %438 = dma.done %s433, 128
        $region68: #{tpu_custom_call.1} parent=63 // pred_fallthru
          _
      $region64: #{tpu_custom_call.1} parent=5 // pred_fallthru
        _
    $region6: #{tpu_custom_call.1} parent=1 // loop_footer
      %s20 = sadd.s32 1, %s16
    $region7: #{tpu_custom_call.1} parent=1 // loop_footer_branch
      %15 = sbr.rel target = $region3
    $region8: #{tpu_custom_call.1} parent=1 // loop_exit
      _
    %439 = vsyncpa [#allocation4], 1
    %s440 = scalar_lea.sflag [#allocation4], 1
    %441 = vsyncpa %s440, 1
    %442 = vsyncpa [#allocation5], 1
    %s443 = scalar_lea.sflag [#allocation5], 1
    %444 = vsyncpa %s443, 1
    %445 = vsyncpa [#allocation6], 1
    %s446 = scalar_lea.sflag [#allocation6], 1
    %447 = vsyncpa %s446, 1

</llo_original>
